<compile_context>
chip_gen: v6e
topology: v6e:2x2x1
jax: 0.10.0
libtpu: 0.0.40
codegen_flags: <defaults>
</compile_context>

<pallas_src>
import jax
import jax.numpy as jnp
from jax.experimental import pallas as pl
from jax.experimental.pallas import tpu as pltpu

LANES = 128  # vreg lane width


def _linear_k1_kernel(x_ref, w_ref, b_ref, o_ref):
    # x_ref: (tile_rows, 128) VMEM
    # w_ref, b_ref: (out_features,) SMEM scalars
    # o_ref: (out_features, tile_rows, 128) VMEM
    x = x_ref[...]
    for o in range(o_ref.shape[0]):          # out_features is tiny & static (2)
        o_ref[o] = x * w_ref[o] + b_ref[o]   # scalar-broadcast FMA on the VPU


def one_linear_forward(x, weight, bias, *, tile_rows=1024):
    """Forward of nn.Linear(1, out_features): y = x @ W^T + b.

    x: (B, 1), weight: (out_features, 1), bias: (out_features,) -> (B, out_features)

    tile_rows=1024 keeps live VMEM buffers (~3 MiB double-buffered, f32) far
    below the scoped-VMEM defaults on v5e/v6e (16/32 MiB) and v7x (32 MiB of
    64 MiB physical), so no vmem_limit_bytes override is needed.
    """
    B, in_features = x.shape
    assert in_features == 1, "OneLinearModule is Linear(1, out_features)"
    out_features = weight.shape[0]
    dtype = x.dtype

    # --- lane-dense view of the batch -----------------------------------
    rows = pl.cdiv(B, LANES)                 # sublane rows needed
    if rows < tile_rows:
        tile_rows = rows                     # one block == full dim (allowed)
    n_tiles = pl.cdiv(rows, tile_rows)
    padded_rows = n_tiles * tile_rows
    total = padded_rows * LANES

    x_flat = x.reshape(B)
    x_lanes = jnp.pad(x_flat, (0, total - B)).reshape(padded_rows, LANES)

    w_vec = weight.reshape(out_features).astype(dtype)   # (out_features,)
    b_vec = bias.reshape(out_features).astype(dtype)     # (out_features,)

    y_lanes = pl.pallas_call(
        _linear_k1_kernel,
        out_shape=jax.ShapeDtypeStruct((out_features, padded_rows, LANES), dtype),
        grid=(n_tiles,),
        in_specs=[
            # streaming input, lane-dense, batch-tiled
            pl.BlockSpec((tile_rows, LANES), lambda i: (i, 0)),
            # tiny constant tables -> SMEM scalars (no VMEM tiles, no per-step DMA)
            pl.BlockSpec(memory_space=pltpu.MemorySpace.SMEM),
            pl.BlockSpec(memory_space=pltpu.MemorySpace.SMEM),
        ],
        out_specs=pl.BlockSpec(
            (out_features, tile_rows, LANES), lambda i: (0, i, 0)
        ),
        compiler_params=pltpu.CompilerParams(
            dimension_semantics=("parallel",),   # no reduction / revisit
        ),
    )(x_lanes, w_vec, b_vec)

    # (out_features, padded_rows, 128) -> (B, out_features); layout plumbing only.
    return y_lanes.reshape(out_features, total)[:, :B].T


if __name__ == "__main__":
    # Deterministic params mirroring OneLinearModule(param_value): every
    # weight and bias element filled with `param_value`.
    param_value = 0.5
    out_features, in_features = 2, 1
    weight = jnp.full((out_features, in_features), param_value, dtype=jnp.float32)  # (2, 1)
    bias = jnp.full((out_features,), param_value, dtype=jnp.float32)                # (2,)

    key = jax.random.PRNGKey(0)
    k1, k2 = jax.random.split(key)

    # Small input consistent with Linear(1, 2): batch of 8, feature dim 1.
    batch = 8
    x = jax.random.normal(k1, (batch, in_features), dtype=jnp.float32)

    y = jax.block_until_ready(one_linear_forward(x, weight, bias))
    y_ref = x @ weight.T + bias
    assert y.shape == (batch, out_features)
    assert jnp.allclose(y, y_ref, atol=1e-6, rtol=1e-6)

    # Second small case that exercises lane padding (B not a multiple of 128).
    x2 = jax.random.normal(k2, (300, in_features), dtype=jnp.float32)
    y2 = jax.block_until_ready(one_linear_forward(x2, weight, bias))
    assert jnp.allclose(y2, x2 @ weight.T + bias, atol=1e-6, rtol=1e-6)

    print("KERNEL_OK")
</pallas_src>

<mosaic_0001>
module attributes {stable_mosaic.version = 11 : i64} {
  func.func @_linear_k1_kernel(%arg0: i32, %arg1: memref<1x128xf32, #tpu.memory_space<vmem>>, %arg2: memref<2xf32, #tpu.memory_space<smem>>, %arg3: memref<2xf32, #tpu.memory_space<smem>>, %arg4: memref<2x1x128xf32, #tpu.memory_space<vmem>>) attributes {dimension_semantics = [#tpu.dimension_semantics<parallel>], iteration_bounds = array<i64: 1>, scalar_prefetch = 0 : i64, scratch_operands = 0 : i64, tpu.core_type = #tpu.core_type<tc>, window_params = [{transform_indices = @transform_0, window_bounds = array<i64: 1, 128>}, {transform_indices = @transform_1, window_bounds = array<i64: 2>}, {transform_indices = @transform_2, window_bounds = array<i64: 2>}, {transform_indices = @transform_3, window_bounds = array<i64: 2, 1, 128>}]} {
    %c0 = arith.constant 0 : index
    %c0_0 = arith.constant 0 : index
    %0 = vector.load %arg1[%c0, %c0_0] : memref<1x128xf32, #tpu.memory_space<vmem>>, vector<1x128xf32>
    %c0_1 = arith.constant 0 : index
    %1 = memref.load %arg2[%c0_1] : memref<2xf32, #tpu.memory_space<smem>>
    %2 = vector.broadcast %1 : f32 to vector<1x128xf32>
    %3 = arith.mulf %0, %2 : vector<1x128xf32>
    %c0_2 = arith.constant 0 : index
    %4 = memref.load %arg3[%c0_2] : memref<2xf32, #tpu.memory_space<smem>>
    %5 = vector.broadcast %4 : f32 to vector<1x128xf32>
    %6 = arith.addf %3, %5 : vector<1x128xf32>
    %c0_3 = arith.constant 0 : index
    %c0_4 = arith.constant 0 : index
    %c0_5 = arith.constant 0 : index
    %7 = vector.load %arg4[%c0_3, %c0_4, %c0_5] : memref<2x1x128xf32, #tpu.memory_space<vmem>>, vector<1x1x128xf32>
    %8 = vector.shape_cast %7 : vector<1x1x128xf32> to vector<1x128xf32>
    %9 = vector.shape_cast %6 : vector<1x128xf32> to vector<1x1x128xf32>
    tpu.vector_store %arg4[%c0_3, %c0_4, %c0_5], %9 {strides = array<i32>} : memref<2x1x128xf32, #tpu.memory_space<vmem>>, vector<1x1x128xf32>,
    %c1 = arith.constant 1 : index
    %10 = memref.load %arg2[%c1] : memref<2xf32, #tpu.memory_space<smem>>
    %11 = vector.broadcast %10 : f32 to vector<1x128xf32>
    %12 = arith.mulf %0, %11 : vector<1x128xf32>
    %c1_6 = arith.constant 1 : index
    %13 = memref.load %arg3[%c1_6] : memref<2xf32, #tpu.memory_space<smem>>
    %14 = vector.broadcast %13 : f32 to vector<1x128xf32>
    %15 = arith.addf %12, %14 : vector<1x128xf32>
    %c1_7 = arith.constant 1 : index
    %c0_8 = arith.constant 0 : index
    %c0_9 = arith.constant 0 : index
    %16 = vector.load %arg4[%c1_7, %c0_8, %c0_9] : memref<2x1x128xf32, #tpu.memory_space<vmem>>, vector<1x1x128xf32>
    %17 = vector.shape_cast %16 : vector<1x1x128xf32> to vector<1x128xf32>
    %18 = vector.shape_cast %15 : vector<1x128xf32> to vector<1x1x128xf32>
    tpu.vector_store %arg4[%c1_7, %c0_8, %c0_9], %18 {strides = array<i32>} : memref<2x1x128xf32, #tpu.memory_space<vmem>>, vector<1x1x128xf32>,
    return
  }
  func.func @transform_0(%arg0: i32) -> (i32, i32) {
    %c0_i32 = arith.constant 0 : i32
    %c0_i32_0 = arith.constant 0 : i32
    return %arg0, %c0_i32 : i32, i32
  }
  func.func @transform_1(%arg0: i32) -> i32 {
    %c0_i32 = arith.constant 0 : i32
    %c0_i32_0 = arith.constant 0 : i32
    return %c0_i32 : i32
  }
  func.func @transform_2(%arg0: i32) -> i32 {
    %c0_i32 = arith.constant 0 : i32
    %c0_i32_0 = arith.constant 0 : i32
    return %c0_i32 : i32
  }
  func.func @transform_3(%arg0: i32) -> (i32, i32, i32) {
    %c0_i32 = arith.constant 0 : i32
    %c0_i32_0 = arith.constant 0 : i32
    %c0_i32_1 = arith.constant 0 : i32
    return %c0_i32, %arg0, %c0_i32_0 : i32, i32, i32
  }
}

</mosaic_0001>

<llo_original>
// kernel: tpu_custom_call.1
$region0: #{tpu_custom_call.1}
  #allocation0 [shape = 'u32[]', space=smem, size = 0x4, offset = 0x4, fixed_abs, tag = 'smem constant byte address 0x4 - core index']
  #allocation1 [shape = 'u32[144,128]{1,0:T(1,128)}', space=vmem, size = 0x12000, scoped, tag = 'internal scratch']
  %s0 = inlined_call_operand.hbm [shape: f32[1,128], index: 0, kind: input, shape index: {}]
  %s1 = inlined_call_operand.vmem [shape: f32[2], index: 1, kind: input, shape index: {}]
  %s2 = inlined_call_operand.vmem [shape: f32[2], index: 2, kind: input, shape index: {}]
  %s3 = inlined_call_operand.hbm [shape: f32[2,1,128], index: 3, kind: output, shape index: {}]
  %s4 = sld [smem:[#allocation0]]
  $region34: #{tpu_custom_call.1} parent=0
    _
  %s6 = ssub.s32 1, %s4
  %s7 = scalar_select 0, %s6, %s4
  $region1: #{tpu_custom_call.1} parent=0
    #allocation2 [shape = 'u8[512]{0}', space=vmem, size = 0x400, scoped, tag = 'input window, operand 0, single buffered']
    #allocation3 [shape = 's32[1]{0}', space=sflag, size = 0x4, scoped, tag = 'scoped memory for tpu_custom_call.1']
    #allocation4 [shape = 's32[1]{0}', space=sflag, size = 0x4, scoped, tag = 'scoped memory for tpu_custom_call.1']
    #allocation5 [shape = 's32[1]{0}', space=sflag, size = 0x4, scoped, tag = 'scoped memory for tpu_custom_call.1']
    #allocation6 [shape = 'u8[512]{0}', space=smem, size = 0x200, scoped, tag = 'input window, operand 1, single buffered']
    #allocation7 [shape = 'u8[512]{0}', space=smem, size = 0x200, scoped, tag = 'input window, operand 2, single buffered']
    #allocation8 [shape = 's32[1]{0}', space=sflag, size = 0x4, scoped, tag = 'scoped memory for tpu_custom_call.1']
    #allocation9 [shape = 'u8[1024]{0}', space=vmem, size = 0x400, scoped, tag = 'output window, operand 0, single buffered']
    %8 = vsyncpa [#allocation3], 0
    %9 = vsyncpa [#allocation5], 0
    %10 = vsyncpa [#allocation8], 0
    %11 = vsyncpa [#allocation4], 0
    // Predicated region
    $region2: #{tpu_custom_call.1} parent=1 // pred_check
      _
    $region3: #{tpu_custom_call.1} parent=1 // pred_check_branch
      %13 = sbr.rel (0) target = $region5
    $region4: #{tpu_custom_call.1} parent=1 // pred_region
      %s15 = ssub.s32 16, 16
      %16 = vsyncadd [#allocation3], %s15
      %s18 = sshll.u32 [#allocation2], 4
      %s19 = int_to_ptr.vmem [resolvable:$true] %s18
      %21 = dma.hbm_to_vmem [thread:$0]  %s0, 16, %s19, [#allocation3]
    $region5: #{tpu_custom_call.1} parent=1 // pred_fallthru
      _
    // Predicated region
    $region6: #{tpu_custom_call.1} parent=1 // pred_check
      _
    $region7: #{tpu_custom_call.1} parent=1 // pred_check_branch
      %23 = sbr.rel (0) target = $region9
    $region8: #{tpu_custom_call.1} parent=1 // pred_region
      %s25 = ssub.s32 16, 16
      %26 = vsyncadd [#allocation5], %s25
      %s28 = sshll.u32 %s1, 4
      %s29 = int_to_ptr.vmem [resolvable:$true] %s28
      %31 = dma.vmem_to_smem %s29, 16, [#allocation6], [#allocation5]
    $region9: #{tpu_custom_call.1} parent=1 // pred_fallthru
      _
    // Predicated region
    $region10: #{tpu_custom_call.1} parent=1 // pred_check
      _
    $region11: #{tpu_custom_call.1} parent=1 // pred_check_branch
      %33 = sbr.rel (0) target = $region13
    $region12: #{tpu_custom_call.1} parent=1 // pred_region
      %s35 = ssub.s32 16, 16
      %36 = vsyncadd [#allocation8], %s35
      %s38 = sshll.u32 %s2, 4
      %s39 = int_to_ptr.vmem [resolvable:$true] %s38
      %41 = dma.vmem_to_smem %s39, 16, [#allocation7], [#allocation8]
    $region13: #{tpu_custom_call.1} parent=1 // pred_fallthru
      _
    // Predicated region
    $region14: #{tpu_custom_call.1} parent=1 // pred_check
      _
    $region15: #{tpu_custom_call.1} parent=1 // pred_check_branch
      %43 = sbr.rel (0) target = $region17
    $region16: #{tpu_custom_call.1} parent=1 // pred_region
      %44 = dma.done [#allocation3], 16
    $region17: #{tpu_custom_call.1} parent=1 // pred_fallthru
      _
    // Predicated region
    $region18: #{tpu_custom_call.1} parent=1 // pred_check
      _
    $region19: #{tpu_custom_call.1} parent=1 // pred_check_branch
      %46 = sbr.rel (0) target = $region21
    $region20: #{tpu_custom_call.1} parent=1 // pred_region
      %47 = dma.done [#allocation5], 16
    $region21: #{tpu_custom_call.1} parent=1 // pred_fallthru
      _
    // Predicated region
    $region22: #{tpu_custom_call.1} parent=1 // pred_check
      _
    $region23: #{tpu_custom_call.1} parent=1 // pred_check_branch
      %49 = sbr.rel (0) target = $region25
    $region24: #{tpu_custom_call.1} parent=1 // pred_region
      %50 = dma.done [#allocation8], 16
    $region25: #{tpu_custom_call.1} parent=1 // pred_fallthru
      _
    %51 = sfence
    %v52 = vld [vmem:[#allocation2] sm:$0x1]
    %s53 = sld [smem:[#allocation6]]
    %v54 = vstv %s53
    %v55 = vmul.f32 %v52, %v54
    %s56 = sld [smem:[#allocation7]]
    %v57 = vstv %s56
    %v58 = vadd.f32 %v55, %v57
    %59 = vst [vmem:[#allocation9] sm:$0x1] %v58
    %s60 = sld [smem:[#allocation6 + $0x1]]
    %v61 = vstv %s60
    %v62 = vmul.f32 %v52, %v61
    %s63 = sld [smem:[#allocation7 + $0x1]]
    %v64 = vstv %s63
    %v65 = vadd.f32 %v62, %v64
    %s66 = scalar_lea.vmem [#allocation9], 1
    %67 = vst [vmem:[%s66] sm:$0x1] %v65
    // Predicated region
    $region26: #{tpu_custom_call.1} parent=1 // pred_check
      _
    $region27: #{tpu_custom_call.1} parent=1 // pred_check_branch
      %69 = sbr.rel (0) target = $region29
    $region28: #{tpu_custom_call.1} parent=1 // pred_region
      %s71 = ssub.s32 32, 32
      %72 = vsyncadd [#allocation4], %s71
      %s73 = sshll.u32 [#allocation9], 4
      %s74 = int_to_ptr.vmem [resolvable:$true] %s73
      %79 = dma.vmem_to_hbm [thread:$0]  %s74, 32, %s3, [#allocation4], 16, 16, 1
    $region29: #{tpu_custom_call.1} parent=1 // pred_fallthru
      _
    // Predicated region
    $region30: #{tpu_custom_call.1} parent=1 // pred_check
      _
    $region31: #{tpu_custom_call.1} parent=1 // pred_check_branch
      %81 = sbr.rel (0) target = $region33
    $region32: #{tpu_custom_call.1} parent=1 // pred_region
      %82 = dma.done [#allocation4], 32
    $region33: #{tpu_custom_call.1} parent=1 // pred_fallthru
      _
    %83 = vsyncpa [#allocation3], 1
    %84 = vsyncpa [#allocation4], 1
    %85 = vsyncpa [#allocation5], 1
    %86 = vsyncpa [#allocation8], 1

</llo_original>
